<compile_context>
chip_gen: v7x
topology: tpu7x:2x2x1
jax: 0.10.0
libtpu: 0.0.40
codegen_flags: <defaults>
</compile_context>

<pallas_src>
import math
from functools import partial

import jax
import jax.numpy as jnp
from jax.experimental import pallas as pl
from jax.experimental.pallas import tpu as pltpu

_LANES = 128


def _drop_path_kernel(s_ref, x_ref, o_ref):
    # s_ref: (tile_b, 1[, 1]) per-sample scale in x.dtype (VMEM).
    # x_ref / o_ref: (tile_b, tile_n) or (tile_b, tile_m, 128) VMEM tiles.
    o_ref[...] = x_ref[...] * s_ref[...]


def _sublane_multiple(dtype) -> int:
    itemsize = jnp.dtype(dtype).itemsize
    return {4: 8, 2: 16, 1: 32}.get(itemsize, 8)


def _round_up(v: int, m: int) -> int:
    return -(-v // m) * m


def _vmem_capacity_bytes() -> int:
    try:
        info_fn = getattr(pltpu, "get_tpu_info", None)
        if info_fn is not None:
            cap = int(info_fn().vmem_capacity_bytes)
            if cap > 0:
                return cap
    except Exception:
        pass
    return 64 << 20  # conservative fallback (v7x per-TensorCore VMEM)


def _tile_and_specs(b: int, n: int, dtype):
    """Pick block sizes + BlockSpecs for the flattened (B, N) problem."""
    itemsize = jnp.dtype(dtype).itemsize
    sub = _sublane_multiple(dtype)
    cap = _vmem_capacity_bytes()

    # ~6 MiB/buffer on v5e/v6e (128 MiB VMEM), ~4 MiB on v7x (64 MiB); never
    # more than 1/4 of the tensor so the grid keeps a handful of steps.
    per_buf_target = max(1 << 20, min(6 << 20, cap // 16))
    total_bytes = b * n * itemsize
    per_buf_bytes = max(min(per_buf_target, max(total_bytes // 4, 1)), 128 << 10)
    per_buf_elems = max(per_buf_bytes // itemsize, sub * _LANES)

    if n % _LANES == 0:
        # ---- dense path: (B, M, 128) view, lane/sublane-dense blocks ----
        m = n // _LANES
        if n >= per_buf_elems:
            tile_b = 1  # one (chunk of a) sample per step; leading dim is unconstrained
            tile_m = min(m, max(sub, ((per_buf_elems // _LANES) // sub) * sub))
        else:
            tile_m = m                                   # whole sample per block
            tile_b = min(b, max(1, per_buf_elems // n))  # many samples per block
        grid = (pl.cdiv(b, tile_b), pl.cdiv(m, tile_m))
        x_view = (b, m, _LANES)
        s_view = (b, 1, 1)
        x_spec = pl.BlockSpec((tile_b, tile_m, _LANES), lambda i, j: (i, j, 0))
        s_spec = pl.BlockSpec((tile_b, 1, 1), lambda i, j: (i, 0, 0))
        x_tile_bytes = tile_b * _round_up(tile_m, sub) * _LANES * itemsize
        s_tile_bytes = tile_b * sub * _LANES * itemsize
    else:
        # ---- ragged path: (B, N) view; trailing partial blocks are masked ----
        if b <= sub:
            tile_b = b                                   # full extent: always legal
        else:
            want_b = max(sub, per_buf_elems // max(n, 1))
            tile_b = b if want_b >= b else max(sub, (min(want_b, b) // sub) * sub)
        eff_b = _round_up(tile_b, sub)                   # VMEM pads sublanes
        per_row = max(_LANES, per_buf_elems // eff_b)
        if n <= per_row:
            tile_n = n                                   # whole row (full extent)
        else:
            tile_n = max(_LANES, min((per_row // _LANES) * _LANES,
                                     (n // _LANES) * _LANES))
        grid = (pl.cdiv(b, tile_b), pl.cdiv(n, tile_n))
        x_view = (b, n)
        s_view = (b, 1)
        x_spec = pl.BlockSpec((tile_b, tile_n), lambda i, j: (i, j))
        s_spec = pl.BlockSpec((tile_b, 1), lambda i, j: (i, 0))
        x_tile_bytes = eff_b * _round_up(tile_n, _LANES) * itemsize
        s_tile_bytes = eff_b * _LANES * itemsize

    # Double-buffered footprint: 2x x-in, 2x out, 2x scale (+ headroom).
    footprint = 4 * x_tile_bytes + 2 * s_tile_bytes
    vmem_limit = int(min(max(footprint + (4 << 20), 8 << 20), (cap * 3) // 4))

    return dict(grid=grid, x_view=x_view, s_view=s_view,
                x_spec=x_spec, s_spec=s_spec, vmem_limit=vmem_limit)


@partial(jax.jit, static_argnames=("drop_prob", "training", "donate_x"))
def drop_path_pallas(x, key, drop_prob: float = 0.0, training: bool = False,
                     donate_x: bool = False):
    """Pallas implementation of DropPath.forward.

    x: (B, ...) array; a Bernoulli keep-mask is drawn per leading-dim sample.
    key: jax PRNG key (torch uses its global RNG stream instead).
    donate_x: alias x's buffer with the output (only useful when the caller
      does not reuse x; XLA inserts a protective copy otherwise).
    """
    if drop_prob == 0.0 or not training:
        return x
    # NOTE: drop_prob == 1.0 gives scale = 0/0 = NaN, matching the PyTorch
    # reference's degenerate behavior.

    keep_prob = 1.0 - float(drop_prob)
    b = x.shape[0]
    n = math.prod(x.shape[1:])

    # Per-sample mask in f32 (same recipe as torch): floor(keep_prob + U[0,1)).
    u = jax.random.uniform(key, (b,), dtype=jnp.float32)
    mask = jnp.floor(jnp.float32(keep_prob) + u)
    scale = (mask / jnp.float32(keep_prob)).astype(x.dtype)  # 0 or 1/keep_prob

    p = _tile_and_specs(b, n, x.dtype)

    out = pl.pallas_call(
        _drop_path_kernel,
        out_shape=jax.ShapeDtypeStruct(p["x_view"], x.dtype),
        grid_spec=pltpu.PrefetchScalarGridSpec(
            num_scalar_prefetch=0,
            grid=p["grid"],
            in_specs=[p["s_spec"], p["x_spec"]],
            out_specs=p["x_spec"],
        ),
        compiler_params=pltpu.CompilerParams(
            dimension_semantics=("parallel", "parallel"),
            vmem_limit_bytes=p["vmem_limit"]),
        input_output_aliases=({1: 0} if donate_x else {}),
    )(scale.reshape(p["s_view"]), x.reshape(p["x_view"]))

    return out.reshape(x.shape)


class DropPath:
    """Mirror of the PyTorch module (no parameters)."""

    def __init__(self, drop_prob=None):
        self.drop_prob = drop_prob
        self.training = True

    def __call__(self, x, key, donate_x: bool = False):
        p = 0.0 if self.drop_prob is None else float(self.drop_prob)
        return drop_path_pallas(x, key, drop_prob=p, training=self.training,
                                donate_x=donate_x)


def _reference(x, key, drop_prob):
    """Pure-JAX reference mirroring torch drop_path (math in f32)."""
    keep_prob = 1.0 - drop_prob
    u = jax.random.uniform(key, (x.shape[0],), dtype=jnp.float32)
    mask = jnp.floor(jnp.float32(keep_prob) + u)
    bshape = (x.shape[0],) + (1,) * (x.ndim - 1)
    return (x.astype(jnp.float32) / keep_prob * mask.reshape(bshape)).astype(x.dtype)


if __name__ == "__main__":
    root = jax.random.PRNGKey(0)
    k1, k2, k3, k4, k5, k6, k_mask = jax.random.split(root, 7)

    drop_prob = 0.1
    module = DropPath(drop_prob=drop_prob)
    module.training = True

    # --- case 1: dense (C*H*W % 128 == 0), single block ---
    x = jax.random.normal(k1, (2, 4, 16, 16), dtype=jnp.float32)
    y = jax.block_until_ready(module(x, k_mask))
    assert y.shape == x.shape and y.dtype == x.dtype
    assert jnp.allclose(y, _reference(x, k_mask, drop_prob), rtol=1e-5, atol=1e-6)

    # --- case 2: ragged features (N = 105), no pad/slice path ---
    x_r = jax.random.normal(k2, (2, 3, 5, 7), dtype=jnp.float32)
    y_r = jax.block_until_ready(module(x_r, k_mask))
    assert jnp.allclose(y_r, _reference(x_r, k_mask, drop_prob), rtol=1e-5, atol=1e-6)

    # --- case 3: multiple samples per block (batch-blocked grid) ---
    x_b = jax.random.normal(k3, (16, 8, 32, 32), dtype=jnp.float32)
    y_b = jax.block_until_ready(module(x_b, k_mask))
    assert jnp.allclose(y_b, _reference(x_b, k_mask, drop_prob), rtol=1e-5, atol=1e-6)

    # --- case 4: feature dim split across grid steps ---
    x_f = jax.random.normal(k4, (2, 16, 64, 64), dtype=jnp.float32)
    y_f = jax.block_until_ready(module(x_f, k_mask))
    assert jnp.allclose(y_f, _reference(x_f, k_mask, drop_prob), rtol=1e-5, atol=1e-6)

    # --- case 5: ragged with a partial (masked-store) trailing block ---
    x_p = jax.random.normal(k5, (2, 10, 500), dtype=jnp.float32)
    y_p = jax.block_until_ready(module(x_p, k_mask))
    assert jnp.allclose(y_p, _reference(x_p, k_mask, drop_prob), rtol=1e-5, atol=1e-6)

    # --- case 6: bf16 input, in-dtype multiply ---
    x_h = jax.random.normal(k6, (4, 8, 16, 16), dtype=jnp.float32).astype(jnp.bfloat16)
    y_h = jax.block_until_ready(module(x_h, k_mask))
    assert y_h.dtype == jnp.bfloat16
    assert jnp.allclose(y_h.astype(jnp.float32),
                        _reference(x_h, k_mask, drop_prob).astype(jnp.float32),
                        rtol=2e-2, atol=2e-2)

    # --- case 7: optional buffer donation (x not reused afterwards) ---
    y_ref_d = _reference(x, k_mask, drop_prob)
    y_d = jax.block_until_ready(module(x, k_mask, donate_x=True))
    assert jnp.allclose(y_d, y_ref_d, rtol=1e-5, atol=1e-6)

    # --- eval-mode / zero-prob path is identity ---
    module.training = False
    x_eval = jax.random.normal(k1, (2, 4, 16, 16), dtype=jnp.float32)
    y_eval = jax.block_until_ready(module(x_eval, k_mask))
    assert jnp.array_equal(y_eval, x_eval)

    print("KERNEL_OK")
</pallas_src>

<mosaic_0001>
module attributes {stable_mosaic.version = 11 : i64} {
  func.func @_drop_path_kernel(%arg0: i32, %arg1: i32, %arg2: memref<2x1x1xf32, #tpu.memory_space<vmem>>, %arg3: memref<2x8x128xf32, #tpu.memory_space<vmem>>, %arg4: memref<2x8x128xf32, #tpu.memory_space<vmem>>) attributes {dimension_semantics = [#tpu.dimension_semantics<parallel>, #tpu.dimension_semantics<parallel>], iteration_bounds = array<i64: 1, 1>, scalar_prefetch = 0 : i64, scratch_operands = 0 : i64, tpu.core_type = #tpu.core_type<tc>, window_params = [{transform_indices = @transform_0, window_bounds = array<i64: 2, 1, 1>}, {transform_indices = @transform_1, window_bounds = array<i64: 2, 8, 128>}, {transform_indices = @transform_2, window_bounds = array<i64: 2, 8, 128>}]} {
    %c0 = arith.constant 0 : index
    %c0_0 = arith.constant 0 : index
    %c0_1 = arith.constant 0 : index
    %0 = vector.load %arg3[%c0, %c0_0, %c0_1] : memref<2x8x128xf32, #tpu.memory_space<vmem>>, vector<2x8x128xf32>
    %c0_2 = arith.constant 0 : index
    %c0_3 = arith.constant 0 : index
    %c0_4 = arith.constant 0 : index
    %1 = vector.load %arg2[%c0_2, %c0_3, %c0_4] : memref<2x1x1xf32, #tpu.memory_space<vmem>>, vector<2x1x1xf32>
    %2 = vector.broadcast %1 : vector<2x1x1xf32> to vector<2x8x128xf32>
    %3 = arith.mulf %0, %2 : vector<2x8x128xf32>
    %c0_5 = arith.constant 0 : index
    %c0_6 = arith.constant 0 : index
    %c0_7 = arith.constant 0 : index
    %4 = vector.load %arg4[%c0_5, %c0_6, %c0_7] : memref<2x8x128xf32, #tpu.memory_space<vmem>>, vector<2x8x128xf32>
    tpu.vector_store %arg4[%c0_5, %c0_6, %c0_7], %3 {strides = array<i32>} : memref<2x8x128xf32, #tpu.memory_space<vmem>>, vector<2x8x128xf32>,
    return
  }
  func.func @transform_0(%arg0: i32, %arg1: i32) -> (i32, i32, i32) {
    %c0_i32 = arith.constant 0 : i32
    %c0_i32_0 = arith.constant 0 : i32
    %c0_i32_1 = arith.constant 0 : i32
    return %arg0, %c0_i32, %c0_i32_0 : i32, i32, i32
  }
  func.func @transform_1(%arg0: i32, %arg1: i32) -> (i32, i32, i32) {
    %c0_i32 = arith.constant 0 : i32
    %c0_i32_0 = arith.constant 0 : i32
    return %arg0, %arg1, %c0_i32 : i32, i32, i32
  }
  func.func @transform_2(%arg0: i32, %arg1: i32) -> (i32, i32, i32) {
    %c0_i32 = arith.constant 0 : i32
    %c0_i32_0 = arith.constant 0 : i32
    return %arg0, %arg1, %c0_i32 : i32, i32, i32
  }
}

</mosaic_0001>

<llo_original>
// kernel: drop_path_pallas.1
$region0: #{drop_path_pallas.1}
  #allocation0 [shape = 'u32[]', space=smem, size = 0x4, offset = 0x4, fixed_abs, tag = 'smem constant byte address 0x4 - core index']
  #allocation1 [shape = 'u32[144,128]{1,0:T(1,128)}', space=vmem, size = 0x12000, scoped, tag = 'internal scratch']
  %s0 = inlined_call_operand.vmem [shape: f32[2,1,1], index: 0, kind: input, shape index: {}]
  %s1 = inlined_call_operand.vmem [shape: f32[2,8,128], index: 1, kind: input, shape index: {}]
  %s2 = inlined_call_operand.vmem [shape: f32[2,8,128], index: 2, kind: output, shape index: {}]
  %s3 = sld [smem:[#allocation0]]
  $region18: #{drop_path_pallas.1} parent=0
    _
  %s5 = ssub.s32 1, %s3
  %s6 = scalar_select 0, %s5, %s3
  // Predicated region
  $region2: #{drop_path_pallas.1} parent=0 // pred_check
    _
  $region3: #{drop_path_pallas.1} parent=0 // pred_check_branch
    %8 = sbr.rel (0) target = $region5
  $region4: #{drop_path_pallas.1} parent=0 // pred_region
    _
  $region5: #{drop_path_pallas.1} parent=0 // pred_fallthru
    _
  // Predicated region
  $region6: #{drop_path_pallas.1} parent=0 // pred_check
    _
  $region7: #{drop_path_pallas.1} parent=0 // pred_check_branch
    %10 = sbr.rel (0) target = $region9
  $region8: #{drop_path_pallas.1} parent=0 // pred_region
    _
  $region9: #{drop_path_pallas.1} parent=0 // pred_fallthru
    _
  %v11 = vld [vmem:[%s1] sm:$0xff]
  %v12 = vld [vmem:[%s1 + $0x8] sm:$0xff]
  %v13 = vld [vmem:[%s0] sm:$0x1]
  %v14 = vld [vmem:[%s0 + $0x1] sm:$0x1]
  %v17 = vlaneseq
  %v18 = vshrl.u32 %v17, 7
  %v19 = vsub.s32 0, %v18
  %v20 = vrot.slane %v13, %v19
  %v21 = vlaneseq
  %v22 = vshrl.u32 %v21, 7
  %v23 = vsub.s32 0, %v22
  %v24 = vrot.slane %v14, %v23
  %25 = vset.pattern.permute.xlu0 0
  %26 = vperm.xlu0 %25, %v20
  %v27 = vpop.permute.xlu0 %26
  %29 = vset.pattern.permute.xlu0 0
  %30 = vperm.xlu0 %29, %v24
  %v31 = vpop.permute.xlu0 %30
  %v33 = vmul.f32 %v11, %v27
  %v34 = vmul.f32 %v12, %v31
  %35 = vst [vmem:[%s2] sm:$0xff] %v33
  %36 = vst [vmem:[%s2 + $0x8] sm:$0xff] %v34
  // Predicated region
  $region10: #{drop_path_pallas.1} parent=0 // pred_check
    _
  $region11: #{drop_path_pallas.1} parent=0 // pred_check_branch
    %38 = sbr.rel (0) target = $region13
  $region12: #{drop_path_pallas.1} parent=0 // pred_region
    _
  $region13: #{drop_path_pallas.1} parent=0 // pred_fallthru
    _
  // Predicated region
  $region14: #{drop_path_pallas.1} parent=0 // pred_check
    _
  $region15: #{drop_path_pallas.1} parent=0 // pred_check_branch
    %40 = sbr.rel (0) target = $region17
  $region16: #{drop_path_pallas.1} parent=0 // pred_region
    _
  $region17: #{drop_path_pallas.1} parent=0 // pred_fallthru
    _

</llo_original>
